<compile_context>
chip_gen: v7x
topology: tpu7x:2x2x1
jax: 0.10.0
libtpu: 0.0.40
codegen_flags: <defaults>
</compile_context>

<pallas_src>
import jax
import jax.numpy as jnp
import numpy as np
from jax import lax
from jax.experimental import pallas as pl
from jax.experimental.pallas import tpu as pltpu

INPUT_DIM = 256
HIDDEN_DIM = 128
HIDDEN2_DIM = HIDDEN_DIM // 2      # 64
OUT_DIM = 2
OUT_ROWS = 8                       # final layer padded 2 -> 8 sublanes (transposed out)
BN_EPS = 1e-5


def _round_up(n, m):
    return ((n + m - 1) // m) * m


# --------------------------------------------------------------------------
# Kernel: one batch tile per grid step.  BN already folded into w/b.
# --------------------------------------------------------------------------
def _mlp_kernel(x_ref, w1_ref, b1_ref, w2_ref, b2_ref, w3_ref, b3_ref, o_ref):
    # In-kernel bf16 cast (x arrives in its native dtype; no host-side pass).
    x = x_ref[...].astype(jnp.bfloat16)                             # [TB, 256]

    # Linear(256->128) [BN folded] + ReLU  (Dropout = identity in eval)
    h = jnp.dot(x, w1_ref[...], preferred_element_type=jnp.float32) + b1_ref[...]
    h = jnp.maximum(h, 0.0).astype(jnp.bfloat16)                    # [TB, 128]

    # Linear(128->64) [BN folded] + ReLU
    h = jnp.dot(h, w2_ref[...], preferred_element_type=jnp.float32) + b2_ref[...]
    h = jnp.maximum(h, 0.0).astype(jnp.bfloat16)                    # [TB, 64]

    # Linear(64->2), computed transposed: w3t [8,64] (rows padded) contracted
    # against h's feature dim -> lane-dense [8, TB] logits tile.
    out_t = lax.dot_general(w3_ref[...], h, (((1,), (1,)), ((), ())),
                            preferred_element_type=jnp.float32)     # [8, TB]
    o_ref[...] = out_t + b3_ref[...]                                # b3t [8, 1] broadcast


# --------------------------------------------------------------------------
# Wrapper: tile-size choice, grid/BlockSpec setup, output slicing.
# --------------------------------------------------------------------------
def _choose_tb(B, tb_max=1024):
    """Batch tile: multiple of 128 (lane-dense transposed output), capped so the
    grid has >= 2 steps when B > 128 (v7x megacore), <= tb_max."""
    tb_max = max(128, (tb_max // 128) * 128)
    if B <= 128:
        return _round_up(max(B, 1), 8)        # single small tile
    half = _round_up((B + 1) // 2, 128)       # >= 2 grid steps
    return min(tb_max, half)


def gpu_mlp_classifier_forward(x, kparams, *, tb_max=1024):
    B, D = x.shape
    assert D == INPUT_DIM

    w1, b1 = kparams["w1"], kparams["b1"]
    w2, b2 = kparams["w2"], kparams["b2"]
    w3t, b3t = kparams["w3t"], kparams["b3t"]

    tb = _choose_tb(B, tb_max)

    if B < tb:
        # Only for tiny batches (B <= 128, B % 8 != 0): pad a handful of rows.
        x_in = jnp.pad(x, ((0, tb - B), (0, 0)))
        out_cols = tb
    else:
        # No host-side pad/copy; the ragged last tile (if any) is handled by
        # Pallas: OOB input rows read garbage that only reaches discarded
        # output lanes (rows are independent), OOB output writes are dropped.
        x_in = x
        out_cols = B

    grid = (pl.cdiv(out_cols, tb),)

    in_specs = [
        pl.BlockSpec((tb, INPUT_DIM), lambda i: (i, 0)),            # x tile (streamed)
        pl.BlockSpec((INPUT_DIM, HIDDEN_DIM), lambda i: (0, 0)),    # w1 (resident)
        pl.BlockSpec((1, HIDDEN_DIM), lambda i: (0, 0)),            # b1
        pl.BlockSpec((HIDDEN_DIM, HIDDEN2_DIM), lambda i: (0, 0)),  # w2
        pl.BlockSpec((1, HIDDEN2_DIM), lambda i: (0, 0)),           # b2
        pl.BlockSpec((OUT_ROWS, HIDDEN2_DIM), lambda i: (0, 0)),    # w3t (transposed, padded)
        pl.BlockSpec((OUT_ROWS, 1), lambda i: (0, 0)),              # b3t
    ]
    out_spec = pl.BlockSpec((OUT_ROWS, tb), lambda i: (0, i))       # transposed logits

    flops = 2 * out_cols * (INPUT_DIM * HIDDEN_DIM
                            + HIDDEN_DIM * HIDDEN2_DIM
                            + HIDDEN2_DIM * OUT_ROWS)
    bytes_accessed = (
        out_cols * INPUT_DIM * x.dtype.itemsize     # stream x in (native dtype)
        + out_cols * OUT_ROWS * 4                   # write transposed f32 logits
        + (INPUT_DIM * HIDDEN_DIM + HIDDEN_DIM * HIDDEN2_DIM
           + OUT_ROWS * HIDDEN2_DIM) * w1.dtype.itemsize
        + (HIDDEN_DIM + HIDDEN2_DIM + OUT_ROWS) * 4  # biases (f32)
    )

    out_t = pl.pallas_call(
        _mlp_kernel,
        out_shape=jax.ShapeDtypeStruct((OUT_ROWS, out_cols), jnp.float32),
        grid=grid,
        in_specs=in_specs,
        out_specs=out_spec,
        compiler_params=pltpu.CompilerParams(
            dimension_semantics=("parallel",),
            vmem_limit_bytes=32 * 1024 * 1024,      # <= 48 MiB headroom on v7x
        ),
        cost_estimate=pl.CostEstimate(
            flops=flops, transcendentals=0, bytes_accessed=bytes_accessed),
    )(x_in, w1, b1, w2, b2, w3t, b3t)

    return out_t[:OUT_DIM, :B].T                    # [B, 2]


# --------------------------------------------------------------------------
# Parameter construction (matches torch init) + host-side BN folding.
# --------------------------------------------------------------------------
def _xavier_uniform(key, fan_out, fan_in):
    limit = float(np.sqrt(6.0 / (fan_in + fan_out)))
    return jax.random.uniform(key, (fan_out, fan_in), jnp.float32, -limit, limit)


def init_params(key, input_dim=INPUT_DIM, hidden_dim=HIDDEN_DIM):
    """Torch-equivalent fresh-init parameters (Linear [out,in] transposed to
    [in,out]; BN gamma=1, beta=0, running_mean=0, running_var=1)."""
    h2 = hidden_dim // 2
    k1, k2, k3 = jax.random.split(key, 3)
    return {
        "w1": _xavier_uniform(k1, hidden_dim, input_dim).T,   # [256, 128]
        "b1": jnp.zeros((hidden_dim,), jnp.float32),
        "g1": jnp.ones((hidden_dim,), jnp.float32),
        "be1": jnp.zeros((hidden_dim,), jnp.float32),
        "m1": jnp.zeros((hidden_dim,), jnp.float32),
        "v1": jnp.ones((hidden_dim,), jnp.float32),

        "w2": _xavier_uniform(k2, h2, hidden_dim).T,          # [128, 64]
        "b2": jnp.zeros((h2,), jnp.float32),
        "g2": jnp.ones((h2,), jnp.float32),
        "be2": jnp.zeros((h2,), jnp.float32),
        "m2": jnp.zeros((h2,), jnp.float32),
        "v2": jnp.ones((h2,), jnp.float32),

        "w3": _xavier_uniform(k3, OUT_DIM, h2).T,             # [64, 2]
        "b3": jnp.zeros((OUT_DIM,), jnp.float32),
    }


def _fold_bn(w, b, gamma, beta, mean, var, eps=BN_EPS):
    """y = gamma*(x@w + b - mean)/sqrt(var+eps) + beta  ==  x@w' + b' (exact)."""
    scale = gamma / jnp.sqrt(var + eps)                        # [out]
    return w * scale[None, :], (b - mean) * scale + beta


def prepare_kernel_params(p, compute_dtype=jnp.bfloat16):
    """Fold BN into the linears; keep layer 3 in torch [out,in] orientation and
    row-pad 2 -> 8 for the transposed lane-dense output; cast weights to bf16."""
    w1, b1 = _fold_bn(p["w1"], p["b1"], p["g1"], p["be1"], p["m1"], p["v1"])
    w2, b2 = _fold_bn(p["w2"], p["b2"], p["g2"], p["be2"], p["m2"], p["v2"])
    w3t = jnp.pad(p["w3"].T, ((0, OUT_ROWS - OUT_DIM), (0, 0)))     # [8, 64]
    b3t = jnp.pad(p["b3"], (0, OUT_ROWS - OUT_DIM)).reshape(-1, 1)  # [8, 1]
    return {
        "w1": w1.astype(compute_dtype), "b1": b1.reshape(1, -1).astype(jnp.float32),
        "w2": w2.astype(compute_dtype), "b2": b2.reshape(1, -1).astype(jnp.float32),
        "w3t": w3t.astype(compute_dtype), "b3t": b3t.astype(jnp.float32),
    }


# --------------------------------------------------------------------------
# References
# --------------------------------------------------------------------------
def _reference_forward_folded(x, kp):
    """Mirrors the kernel's dtype path (bf16 operands, f32 accumulation)."""
    xc = x.astype(jnp.bfloat16)
    h = jnp.dot(xc, kp["w1"], preferred_element_type=jnp.float32) + kp["b1"]
    h = jnp.maximum(h, 0.0).astype(jnp.bfloat16)
    h = jnp.dot(h, kp["w2"], preferred_element_type=jnp.float32) + kp["b2"]
    h = jnp.maximum(h, 0.0).astype(jnp.bfloat16)
    out_t = lax.dot_general(kp["w3t"], h, (((1,), (1,)), ((), ())),
                            preferred_element_type=jnp.float32) + kp["b3t"]
    return out_t[:OUT_DIM, :].T


def _reference_forward_f32(x, p):
    """Unfolded f32 eval-mode reference (torch semantics)."""
    h = x @ p["w1"] + p["b1"]
    h = (h - p["m1"]) / jnp.sqrt(p["v1"] + BN_EPS) * p["g1"] + p["be1"]
    h = jnp.maximum(h, 0.0)
    h = h @ p["w2"] + p["b2"]
    h = (h - p["m2"]) / jnp.sqrt(p["v2"] + BN_EPS) * p["g2"] + p["be2"]
    h = jnp.maximum(h, 0.0)
    return h @ p["w3"] + p["b3"]


if __name__ == "__main__":
    key = jax.random.PRNGKey(0)
    kx, kp = jax.random.split(key)

    B = 256  # > 1 required by BatchNorm1d in the torch module
    x = jax.random.normal(kx, (B, INPUT_DIM), jnp.float32)

    params = init_params(kp)
    kparams = prepare_kernel_params(params)

    # At this demo size _choose_tb picks tb=128 -> a 2-step ("parallel",) grid.
    out = gpu_mlp_classifier_forward(x, kparams)
    out = jax.block_until_ready(out)
    assert out.shape == (B, OUT_DIM)

    # Tight check against a reference that mirrors the kernel's bf16/f32 path.
    ref_folded = _reference_forward_folded(x, kparams)
    np.testing.assert_allclose(np.asarray(out), np.asarray(ref_folded),
                               rtol=1e-2, atol=1e-2)

    # Loose check against the full-precision, unfolded (torch-semantics) ref.
    ref_f32 = _reference_forward_f32(x, params)
    np.testing.assert_allclose(np.asarray(out), np.asarray(ref_f32),
                               rtol=5e-2, atol=5e-2)

    print("KERNEL_OK")
</pallas_src>

<mosaic_0001>
module attributes {stable_mosaic.version = 11 : i64} {
  func.func @_mlp_kernel(%arg0: i32, %arg1: memref<128x256xf32, #tpu.memory_space<vmem>>, %arg2: memref<256x128xbf16, #tpu.memory_space<vmem>>, %arg3: memref<1x128xf32, #tpu.memory_space<vmem>>, %arg4: memref<128x64xbf16, #tpu.memory_space<vmem>>, %arg5: memref<1x64xf32, #tpu.memory_space<vmem>>, %arg6: memref<8x64xbf16, #tpu.memory_space<vmem>>, %arg7: memref<8x1xf32, #tpu.memory_space<vmem>>, %arg8: memref<8x128xf32, #tpu.memory_space<vmem>>) attributes {dimension_semantics = [#tpu.dimension_semantics<parallel>], iteration_bounds = array<i64: 2>, scalar_prefetch = 0 : i64, scratch_operands = 0 : i64, tpu.core_type = #tpu.core_type<tc>, window_params = [{transform_indices = @transform_0, window_bounds = array<i64: 128, 256>}, {pipeline_mode = #tpu.pipeline_mode<synchronous>, transform_indices = @transform_1, window_bounds = array<i64: 256, 128>}, {pipeline_mode = #tpu.pipeline_mode<synchronous>, transform_indices = @transform_2, window_bounds = array<i64: 1, 128>}, {pipeline_mode = #tpu.pipeline_mode<synchronous>, transform_indices = @transform_3, window_bounds = array<i64: 128, 64>}, {pipeline_mode = #tpu.pipeline_mode<synchronous>, transform_indices = @transform_4, window_bounds = array<i64: 1, 64>}, {pipeline_mode = #tpu.pipeline_mode<synchronous>, transform_indices = @transform_5, window_bounds = array<i64: 8, 64>}, {pipeline_mode = #tpu.pipeline_mode<synchronous>, transform_indices = @transform_6, window_bounds = array<i64: 8, 1>}, {transform_indices = @transform_7, window_bounds = array<i64: 8, 128>}]} {
    %c0 = arith.constant 0 : index
    %c0_0 = arith.constant 0 : index
    %0 = vector.load %arg1[%c0, %c0_0] : memref<128x256xf32, #tpu.memory_space<vmem>>, vector<128x256xf32>
    %1 = arith.truncf %0 : vector<128x256xf32> to vector<128x256xbf16>
    %c0_1 = arith.constant 0 : index
    %c0_2 = arith.constant 0 : index
    %2 = vector.load %arg2[%c0_1, %c0_2] : memref<256x128xbf16, #tpu.memory_space<vmem>>, vector<256x128xbf16>
    %cst = arith.constant dense<0.000000e+00> : vector<128x128xf32>
    %3 = tpu.matmul %1, %2, %cst {dimension_numbers = #tpu.dot_dimension_numbers<[1], [0], [0], [1], [0, 0, 1, 1], [], []>} : vector<128x256xbf16>, vector<256x128xbf16>, vector<128x128xf32> -> vector<128x128xf32>
    %c0_3 = arith.constant 0 : index
    %c0_4 = arith.constant 0 : index
    %4 = vector.load %arg3[%c0_3, %c0_4] : memref<1x128xf32, #tpu.memory_space<vmem>>, vector<1x128xf32>
    %5 = vector.broadcast %4 : vector<1x128xf32> to vector<128x128xf32>
    %6 = arith.addf %3, %5 : vector<128x128xf32>
    %cst_5 = arith.constant 0.000000e+00 : f32
    %7 = vector.broadcast %cst_5 : f32 to vector<128x128xf32>
    %8 = arith.maximumf %6, %7 : vector<128x128xf32>
    %9 = arith.truncf %8 : vector<128x128xf32> to vector<128x128xbf16>
    %c0_6 = arith.constant 0 : index
    %c0_7 = arith.constant 0 : index
    %10 = vector.load %arg4[%c0_6, %c0_7] : memref<128x64xbf16, #tpu.memory_space<vmem>>, vector<128x64xbf16>
    %cst_8 = arith.constant dense<0.000000e+00> : vector<128x64xf32>
    %11 = tpu.matmul %9, %10, %cst_8 {dimension_numbers = #tpu.dot_dimension_numbers<[1], [0], [0], [1], [0, 0, 1, 1], [], []>} : vector<128x128xbf16>, vector<128x64xbf16>, vector<128x64xf32> -> vector<128x64xf32>
    %c0_9 = arith.constant 0 : index
    %c0_10 = arith.constant 0 : index
    %12 = vector.load %arg5[%c0_9, %c0_10] : memref<1x64xf32, #tpu.memory_space<vmem>>, vector<1x64xf32>
    %13 = vector.broadcast %12 : vector<1x64xf32> to vector<128x64xf32>
    %14 = arith.addf %11, %13 : vector<128x64xf32>
    %cst_11 = arith.constant 0.000000e+00 : f32
    %15 = vector.broadcast %cst_11 : f32 to vector<128x64xf32>
    %16 = arith.maximumf %14, %15 : vector<128x64xf32>
    %17 = arith.truncf %16 : vector<128x64xf32> to vector<128x64xbf16>
    %c0_12 = arith.constant 0 : index
    %c0_13 = arith.constant 0 : index
    %18 = vector.load %arg6[%c0_12, %c0_13] : memref<8x64xbf16, #tpu.memory_space<vmem>>, vector<8x64xbf16>
    %cst_14 = arith.constant dense<0.000000e+00> : vector<8x128xf32>
    %19 = tpu.matmul %18, %17, %cst_14 {dimension_numbers = #tpu.dot_dimension_numbers<[1], [1], [0], [0], [0, 0, 1, 0], [], []>} : vector<8x64xbf16>, vector<128x64xbf16>, vector<8x128xf32> -> vector<8x128xf32>
    %c0_15 = arith.constant 0 : index
    %c0_16 = arith.constant 0 : index
    %20 = vector.load %arg7[%c0_15, %c0_16] : memref<8x1xf32, #tpu.memory_space<vmem>>, vector<8x1xf32>
    %21 = vector.broadcast %20 : vector<8x1xf32> to vector<8x128xf32>
    %22 = arith.addf %19, %21 : vector<8x128xf32>
    %c0_17 = arith.constant 0 : index
    %c0_18 = arith.constant 0 : index
    %23 = vector.load %arg8[%c0_17, %c0_18] : memref<8x128xf32, #tpu.memory_space<vmem>>, vector<8x128xf32>
    tpu.vector_store %arg8[%c0_17, %c0_18], %22 {strides = array<i32>} : memref<8x128xf32, #tpu.memory_space<vmem>>, vector<8x128xf32>,
    return
  }
  func.func @transform_0(%arg0: i32) -> (i32, i32) {
    %c0_i32 = arith.constant 0 : i32
    %c0_i32_0 = arith.constant 0 : i32
    return %arg0, %c0_i32 : i32, i32
  }
  func.func @transform_1(%arg0: i32) -> (i32, i32) {
    %c0_i32 = arith.constant 0 : i32
    %c0_i32_0 = arith.constant 0 : i32
    %c0_i32_1 = arith.constant 0 : i32
    return %c0_i32, %c0_i32_0 : i32, i32
  }
  func.func @transform_2(%arg0: i32) -> (i32, i32) {
    %c0_i32 = arith.constant 0 : i32
    %c0_i32_0 = arith.constant 0 : i32
    %c0_i32_1 = arith.constant 0 : i32
    return %c0_i32, %c0_i32_0 : i32, i32
  }
  func.func @transform_3(%arg0: i32) -> (i32, i32) {
    %c0_i32 = arith.constant 0 : i32
    %c0_i32_0 = arith.constant 0 : i32
    %c0_i32_1 = arith.constant 0 : i32
    return %c0_i32, %c0_i32_0 : i32, i32
  }
  func.func @transform_4(%arg0: i32) -> (i32, i32) {
    %c0_i32 = arith.constant 0 : i32
    %c0_i32_0 = arith.constant 0 : i32
    %c0_i32_1 = arith.constant 0 : i32
    return %c0_i32, %c0_i32_0 : i32, i32
  }
  func.func @transform_5(%arg0: i32) -> (i32, i32) {
    %c0_i32 = arith.constant 0 : i32
    %c0_i32_0 = arith.constant 0 : i32
    %c0_i32_1 = arith.constant 0 : i32
    return %c0_i32, %c0_i32_0 : i32, i32
  }
  func.func @transform_6(%arg0: i32) -> (i32, i32) {
    %c0_i32 = arith.constant 0 : i32
    %c0_i32_0 = arith.constant 0 : i32
    %c0_i32_1 = arith.constant 0 : i32
    return %c0_i32, %c0_i32_0 : i32, i32
  }
  func.func @transform_7(%arg0: i32) -> (i32, i32) {
    %c0_i32 = arith.constant 0 : i32
    %c0_i32_0 = arith.constant 0 : i32
    return %c0_i32, %arg0 : i32, i32
  }
}

</mosaic_0001>

<llo_original>
// kernel: tpu_custom_call.1
$region0: #{tpu_custom_call.1}
  #allocation0 [shape = 'u32[]', space=smem, size = 0x4, offset = 0x4, fixed_abs, tag = 'smem constant byte address 0x4 - core index']
  #allocation1 [shape = 'u32[144,128]{1,0:T(1,128)}', space=vmem, size = 0x12000, scoped, tag = 'internal scratch']
  %s0 = inlined_call_operand.hbm [shape: f32[256,256], index: 0, kind: input, shape index: {}]
  %s1 = inlined_call_operand.hbm [shape: bf16[256,128], index: 1, kind: input, shape index: {}]
  %s2 = inlined_call_operand.vmem [shape: f32[1,128], index: 2, kind: input, shape index: {}]
  %s3 = inlined_call_operand.vmem [shape: bf16[128,64], index: 3, kind: input, shape index: {}]
  %s4 = inlined_call_operand.vmem [shape: f32[1,64], index: 4, kind: input, shape index: {}]
  %s5 = inlined_call_operand.vmem [shape: bf16[8,64], index: 5, kind: input, shape index: {}]
  %s6 = inlined_call_operand.vmem [shape: f32[8,1], index: 6, kind: input, shape index: {}]
  %s7 = inlined_call_operand.hbm [shape: f32[8,256], index: 7, kind: output, shape index: {}]
  %s8 = sld [smem:[#allocation0]]
  $region69: #{tpu_custom_call.1} parent=0
    _
  %s10 = ssub.s32 1, %s8
  %s11 = scalar_select 0, %s10, %s8
  $region1: #{tpu_custom_call.1} parent=0
    #allocation2 [shape = 'u8[262144]{0}', space=vmem, size = 0x40000, scoped, tag = 'input window, operand 0']
    #allocation3 [shape = 's32[2]{0}', space=sflag, size = 0x8, scoped, tag = 'scoped memory for tpu_custom_call.1']
    #allocation4 [shape = 's32[2]{0}', space=sflag, size = 0x8, scoped, tag = 'scoped memory for tpu_custom_call.1']
    #allocation5 [shape = 'u8[65536]{0}', space=vmem, size = 0x10000, scoped, tag = 'input window, operand 1, single buffered']
    #allocation6 [shape = 's32[1]{0}', space=sflag, size = 0x4, scoped, tag = 'scoped memory for tpu_custom_call.1']
    #allocation7 [shape = 'u8[8192]{0}', space=vmem, size = 0x2000, scoped, tag = 'output window, operand 0']
    %12 = vsyncpa [#allocation3], 0
    %s13 = scalar_lea.sflag [#allocation3], 1
    %14 = vsyncpa %s13, 0
    %15 = vsyncpa [#allocation6], 0
    %16 = vsyncpa [#allocation4], 0
    %s17 = scalar_lea.sflag [#allocation4], 1
    %18 = vsyncpa %s17, 0
    loop: start=0, step=1, limit=4
    $region2: #{tpu_custom_call.1} parent=1 // loop_pre_header
      _
    $region3: #{tpu_custom_call.1} parent=1 // loop_header
      %s20 = sphi 0, %s24
      %p21 = scmp.ge.s32.totalorder %s20, 4
      %s30 = sphi 0, %s32
      %s33 = sphi 0, %s30
      %s34 = sphi 0, %s33
      %s50 = sphi 0, %s34
      %s54 = sphi 0, %s54
      %s56 = sphi 0, %s54
      %s57 = sphi 0, %s56
      %s71 = sphi 0, %s57
      %s75 = sphi 0, %s75
      %s77 = sphi 0, %s75
      %s78 = sphi 0, %s77
      %s92 = sphi 0, %s78
      %s96 = sphi 0, %s96
      %s98 = sphi 0, %s96
      %s99 = sphi 0, %s98
      %s113 = sphi 0, %s99
      %s117 = sphi 0, %s117
      %s119 = sphi 0, %s117
      %s120 = sphi 0, %s119
      %s134 = sphi 0, %s120
      %s138 = sphi 0, %s138
      %s140 = sphi 0, %s138
      %s141 = sphi 0, %s140
      %s155 = sphi 0, %s141
      %s159 = sphi 0, %s159
      %s161 = sphi 0, %s159
      %s162 = sphi 0, %s161
      %s176 = sphi 0, %s162
      %s182 = sphi 0, %s184
      %s185 = sphi 0, %s182
      %s186 = sphi 0, %s185
      %s202 = sphi 0, %s186
    $region4: #{tpu_custom_call.1} parent=1 // loop_header_branch
      %23 = sbr.rel (%p21) target = $region8
    $region5: #{tpu_custom_call.1} parent=1 // loop_body
      %s25 = ssub.s32 %s20, 1
      %s26 = ssub.s32 %s20, 2
      %s27 = sadd.s32 %s20, 1
      %s28 = ssub.s32 %s20, %s27
      %p29 = scmp.eq.s32.totalorder %s28, 0
      %s31 = sadd.s32 %s30, 1
      %s32 = scalar_select %p29, %s30, %s31
      %p35 = pneg %p29
      %p36 = scmp.eq.s32.totalorder %s20, 1
      %p37 = por %p35, %p36
      %p38 = scmp.ne.s32.totalorder %s30, %s33
      %p39 = scmp.eq.s32.totalorder %s20, 0
      %p40 = por %p38, %p39
      %p41 = scmp.ne.s32.totalorder %s30, %s33
      %p42 = scmp.eq.s32.totalorder %s25, 1
      %p43 = por %p41, %p42
      %p44 = scmp.ne.s32.totalorder %s33, %s34
      %p45 = scmp.eq.s32.totalorder %s25, 0
      %p46 = por %p44, %p45
      %p47 = scmp.ne.s32.totalorder %s33, %s34
      %p48 = scmp.eq.s32.totalorder %s26, 1
      %p49 = por %p47, %p48
      %p51 = scmp.ne.s32.totalorder %s34, %s50
      %p52 = scmp.eq.s32.totalorder %s26, 0
      %p53 = por %p51, %p52
      %s55 = sadd.s32 %s54, 1
      %p58 = scmp.eq.s32.totalorder %s20, 1
      %p59 = scmp.ne.s32.totalorder %s54, %s56
      %p60 = scmp.eq.s32.totalorder %s20, 0
      %p61 = por %p59, %p60
      %p62 = scmp.ne.s32.totalorder %s54, %s56
      %p63 = scmp.eq.s32.totalorder %s25, 1
      %p64 = por %p62, %p63
      %p65 = scmp.ne.s32.totalorder %s56, %s57
      %p66 = scmp.eq.s32.totalorder %s25, 0
      %p67 = por %p65, %p66
      %p68 = scmp.ne.s32.totalorder %s56, %s57
      %p69 = scmp.eq.s32.totalorder %s26, 1
      %p70 = por %p68, %p69
      %p72 = scmp.ne.s32.totalorder %s57, %s71
      %p73 = scmp.eq.s32.totalorder %s26, 0
      %p74 = por %p72, %p73
      %s76 = sadd.s32 %s75, 1
      %p79 = scmp.eq.s32.totalorder %s20, 1
      %p80 = scmp.ne.s32.totalorder %s75, %s77
      %p81 = scmp.eq.s32.totalorder %s20, 0
      %p82 = por %p80, %p81
      %p83 = scmp.ne.s32.totalorder %s75, %s77
      %p84 = scmp.eq.s32.totalorder %s25, 1
      %p85 = por %p83, %p84
      %p86 = scmp.ne.s32.totalorder %s77, %s78
      %p87 = scmp.eq.s32.totalorder %s25, 0
      %p88 = por %p86, %p87
      %p89 = scmp.ne.s32.totalorder %s77, %s78
      %p90 = scmp.eq.s32.totalorder %s26, 1
      %p91 = por %p89, %p90
      %p93 = scmp.ne.s32.totalorder %s78, %s92
      %p94 = scmp.eq.s32.totalorder %s26, 0
      %p95 = por %p93, %p94
      %s97 = sadd.s32 %s96, 1
      %p100 = scmp.eq.s32.totalorder %s20, 1
      %p101 = scmp.ne.s32.totalorder %s96, %s98
      %p102 = scmp.eq.s32.totalorder %s20, 0
      %p103 = por %p101, %p102
      %p104 = scmp.ne.s32.totalorder %s96, %s98
      %p105 = scmp.eq.s32.totalorder %s25, 1
      %p106 = por %p104, %p105
      %p107 = scmp.ne.s32.totalorder %s98, %s99
      %p108 = scmp.eq.s32.totalorder %s25, 0
      %p109 = por %p107, %p108
      %p110 = scmp.ne.s32.totalorder %s98, %s99
      %p111 = scmp.eq.s32.totalorder %s26, 1
      %p112 = por %p110, %p111
      %p114 = scmp.ne.s32.totalorder %s99, %s113
      %p115 = scmp.eq.s32.totalorder %s26, 0
      %p116 = por %p114, %p115
      %s118 = sadd.s32 %s117, 1
      %p121 = scmp.eq.s32.totalorder %s20, 1
      %p122 = scmp.ne.s32.totalorder %s117, %s119
      %p123 = scmp.eq.s32.totalorder %s20, 0
      %p124 = por %p122, %p123
      %p125 = scmp.ne.s32.totalorder %s117, %s119
      %p126 = scmp.eq.s32.totalorder %s25, 1
      %p127 = por %p125, %p126
      %p128 = scmp.ne.s32.totalorder %s119, %s120
      %p129 = scmp.eq.s32.totalorder %s25, 0
      %p130 = por %p128, %p129
      %p131 = scmp.ne.s32.totalorder %s119, %s120
      %p132 = scmp.eq.s32.totalorder %s26, 1
      %p133 = por %p131, %p132
      %p135 = scmp.ne.s32.totalorder %s120, %s134
      %p136 = scmp.eq.s32.totalorder %s26, 0
      %p137 = por %p135, %p136
      %s139 = sadd.s32 %s138, 1
      %p142 = scmp.eq.s32.totalorder %s20, 1
      %p143 = scmp.ne.s32.totalorder %s138, %s140
      %p144 = scmp.eq.s32.totalorder %s20, 0
      %p145 = por %p143, %p144
      %p146 = scmp.ne.s32.totalorder %s138, %s140
      %p147 = scmp.eq.s32.totalorder %s25, 1
      %p148 = por %p146, %p147
      %p149 = scmp.ne.s32.totalorder %s140, %s141
      %p150 = scmp.eq.s32.totalorder %s25, 0
      %p151 = por %p149, %p150
      %p152 = scmp.ne.s32.totalorder %s140, %s141
      %p153 = scmp.eq.s32.totalorder %s26, 1
      %p154 = por %p152, %p153
      %p156 = scmp.ne.s32.totalorder %s141, %s155
      %p157 = scmp.eq.s32.totalorder %s26, 0
      %p158 = por %p156, %p157
      %s160 = sadd.s32 %s159, 1
      %p163 = scmp.eq.s32.totalorder %s20, 1
      %p164 = scmp.ne.s32.totalorder %s159, %s161
      %p165 = scmp.eq.s32.totalorder %s20, 0
      %p166 = por %p164, %p165
      %p167 = scmp.ne.s32.totalorder %s159, %s161
      %p168 = scmp.eq.s32.totalorder %s25, 1
      %p169 = por %p167, %p168
      %p170 = scmp.ne.s32.totalorder %s161, %s162
      %p171 = scmp.eq.s32.totalorder %s25, 0
      %p172 = por %p170, %p171
      %p173 = scmp.ne.s32.totalorder %s161, %s162
      %p174 = scmp.eq.s32.totalorder %s26, 1
      %p175 = por %p173, %p174
      %p177 = scmp.ne.s32.totalorder %s162, %s176
      %p178 = scmp.eq.s32.totalorder %s26, 0
      %p179 = por %p177, %p178
      %s180 = ssub.s32 %s20, %s27
      %p181 = scmp.eq.s32.totalorder %s180, 0
      %s183 = sadd.s32 %s182, 1
      %s184 = scalar_select %p181, %s182, %s183
      %p187 = pneg %p181
      %p188 = scmp.eq.s32.totalorder %s20, 1
      %p189 = por %p187, %p188
      %p190 = scmp.ne.s32.totalorder %s182, %s185
      %p191 = scmp.eq.s32.totalorder %s20, 0
      %p192 = por %p190, %p191
      %p193 = scmp.ne.s32.totalorder %s182, %s185
      %p194 = scmp.eq.s32.totalorder %s25, 1
      %p195 = por %p193, %p194
      %p196 = scmp.ne.s32.totalorder %s185, %s186
      %p197 = scmp.eq.s32.totalorder %s25, 0
      %p198 = por %p196, %p197
      %p199 = scmp.ne.s32.totalorder %s185, %s186
      %p200 = scmp.eq.s32.totalorder %s26, 1
      %p201 = por %p199, %p200
      %p203 = scmp.ne.s32.totalorder %s186, %s202
      %p204 = scmp.eq.s32.totalorder %s26, 0
      %p205 = por %p203, %p204
      %p206 = scmp.le.s32.totalorder 1, %s20
      %p207 = scmp.lt.s32.totalorder %s20, 3
      %p208 = pnand %p206, %p207
      %p209 = pneg %p208
      // Predicated region
      $region9: #{tpu_custom_call.1} parent=5 // pred_check
        _
      $region10: #{tpu_custom_call.1} parent=5 // pred_check_branch
        %211 = sbr.rel (%p208) target = $region12
      $region11: #{tpu_custom_call.1} parent=5 // pred_region
        %s212 = ssub.s32 %s20, 1
        // Predicated region
        $region13: #{tpu_custom_call.1} parent=11 // pred_check
          %p213 = pneg %p67
        $region14: #{tpu_custom_call.1} parent=11 // pred_check_branch
          %215 = sbr.rel (%p213) target = $region16
        $region15: #{tpu_custom_call.1} parent=11 // pred_region
          %s217 = ssub.s32 2048, 2048
          %218 = vsyncadd [#allocation6], %s217
          %s219 = sshll.u32 [#allocation5], 4
          %s220 = int_to_ptr.vmem [resolvable:$true] %s219
          %225 = dma.hbm_to_vmem [thread:$0]  %s1, 2048, %s220, [#allocation6], 64, 64, 4
        $region16: #{tpu_custom_call.1} parent=11 // pred_fallthru
          _
        // Predicated region
        $region17: #{tpu_custom_call.1} parent=11 // pred_check
          %p226 = pneg %p88
        $region18: #{tpu_custom_call.1} parent=11 // pred_check_branch
          %228 = sbr.rel (%p226) target = $region20
        $region19: #{tpu_custom_call.1} parent=11 // pred_region
          _
        $region20: #{tpu_custom_call.1} parent=11 // pred_fallthru
          _
        // Predicated region
        $region21: #{tpu_custom_call.1} parent=11 // pred_check
          %p229 = pneg %p109
        $region22: #{tpu_custom_call.1} parent=11 // pred_check_branch
          %231 = sbr.rel (%p229) target = $region24
        $region23: #{tpu_custom_call.1} parent=11 // pred_region
          _
        $region24: #{tpu_custom_call.1} parent=11 // pred_fallthru
          _
        // Predicated region
        $region25: #{tpu_custom_call.1} parent=11 // pred_check
          %p232 = pneg %p130
        $region26: #{tpu_custom_call.1} parent=11 // pred_check_branch
          %234 = sbr.rel (%p232) target = $region28
        $region27: #{tpu_custom_call.1} parent=11 // pred_region
          _
        $region28: #{tpu_custom_call.1} parent=11 // pred_fallthru
          _
        // Predicated region
        $region29: #{tpu_custom_call.1} parent=11 // pred_check
          %p235 = pneg %p151
        $region30: #{tpu_custom_call.1} parent=11 // pred_check_branch
          %237 = sbr.rel (%p235) target = $region32
        $region31: #{tpu_custom_call.1} parent=11 // pred_region
          _
        $region32: #{tpu_custom_call.1} parent=11 // pred_fallthru
          _
        // Predicated region
        $region33: #{tpu_custom_call.1} parent=11 // pred_check
          %p238 = pneg %p172
        $region34: #{tpu_custom_call.1} parent=11 // pred_check_branch
          %240 = sbr.rel (%p238) target = $region36
        $region35: #{tpu_custom_call.1} parent=11 // pred_region
          _
        $region36: #{tpu_custom_call.1} parent=11 // pred_fallthru
          _
      $region12: #{tpu_custom_call.1} parent=5 // pred_fallthru
        _
      %p241 = scmp.lt.s32.totalorder %s20, 2
      // Predicated region
      $region37: #{tpu_custom_call.1} parent=5 // pred_check
        %p242 = pneg %p241
      $region38: #{tpu_custom_call.1} parent=5 // pred_check_branch
        %244 = sbr.rel (%p242) target = $region40
      $region39: #{tpu_custom_call.1} parent=5 // pred_region
        // Predicated region
        $region41: #{tpu_custom_call.1} parent=39 // pred_check
          %p245 = pneg %p40
        $region42: #{tpu_custom_call.1} parent=39 // pred_check_branch
          %247 = sbr.rel (%p245) target = $region44
        $region43: #{tpu_custom_call.1} parent=39 // pred_region
          %s248 = sand.u32 %s30, 1
          %s249 = scalar_lea.sflag [#allocation3], %s248
          %s250 = sand.u32 %s30, 1
          %s251 = smul.addr %s250, 256
          %s252 = scalar_lea.vmem [#allocation2], %s251
          %s253 = smul.u32 16, %s20
          %s255 = ssub.s32 4096, 4096
          %256 = vsyncadd %s249, %s255
          %s257 = smul.addr %s253, 2
          %s258 = smul.addr %s257, 128
          %s259 = scalar_lea.hbm %s0, %s258
          %s260 = sshll.u32 %s252, 4
          %s261 = int_to_ptr.vmem [resolvable:$true] %s260
          %266 = dma.hbm_to_vmem [thread:$0]  %s259, 4096, %s261, %s249, 256, 256, 16
        $region44: #{tpu_custom_call.1} parent=39 // pred_fallthru
          _
      $region40: #{tpu_custom_call.1} parent=5 // pred_fallthru
        _
      %p267 = scmp.le.s32.totalorder 1, %s20
      %p268 = scmp.lt.s32.totalorder %s20, 3
      %p269 = pnand %p267, %p268
      %p270 = pneg %p269
      // Predicated region
      $region45: #{tpu_custom_call.1} parent=5 // pred_check
        _
      $region46: #{tpu_custom_call.1} parent=5 // pred_check_branch
        %272 = sbr.rel (%p269) target = $region48
      $region47: #{tpu_custom_call.1} parent=5 // pred_region
        %s273 = ssub.s32 %s20, 1
        %s274 = sand.u32 %s33, 1
        %s275 = scalar_lea.sflag [#allocation3], %s274
        %s276 = sand.u32 %s33, 1
        %s277 = smul.addr %s276, 256
        %s278 = scalar_lea.vmem [#allocation2], %s277
        // Predicated region
        $region49: #{tpu_custom_call.1} parent=47 // pred_check
          %p279 = pneg %p46
        $region50: #{tpu_custom_call.1} parent=47 // pred_check_branch
          %281 = sbr.rel (%p279) target = $region52
        $region51: #{tpu_custom_call.1} parent=47 // pred_region
          %282 = dma.done %s275, 4096
        $region52: #{tpu_custom_call.1} parent=47 // pred_fallthru
          _
        // Predicated region
        $region53: #{tpu_custom_call.1} parent=47 // pred_check
          %p283 = pneg %p67
        $region54: #{tpu_custom_call.1} parent=47 // pred_check_branch
          %285 = sbr.rel (%p283) target = $region56
        $region55: #{tpu_custom_call.1} parent=47 // pred_region
          %286 = dma.done [#allocation6], 2048
        $region56: #{tpu_custom_call.1} parent=47 // pred_fallthru
          _
        %s287 = sand.u32 %s33, 1
        %s288 = scalar_lea.sflag [#allocation3], %s287
        %s289 = sand.u32 %s33, 1
        %s290 = smul.addr %s289, 256
        %s291 = scalar_lea.vmem [#allocation2], %s290
        %p292 = pneg %p46
        %p293 = pneg %p43
        %p294 = pneg %p67
        %p295 = pneg %p64
        %p296 = pneg %p88
        %p297 = pneg %p85
        %p298 = pneg %p109
        %p299 = pneg %p106
        %p300 = pneg %p130
        %p301 = pneg %p127
        %p302 = pneg %p151
        %p303 = pneg %p148
        %p304 = pneg %p172
        %p305 = pneg %p169
        %p306 = pneg %p198
        %p307 = pneg %p195
        %s308 = sand.u32 %s185, 1
        %s309 = scalar_lea.sflag [#allocation4], %s308
        %s310 = sand.u32 %s185, 1
        %s311 = smul.addr %s310, 8
        %s312 = scalar_lea.vmem [#allocation7], %s311
        %s313 = smul.u32 16, %s25
        %v315 = vld [vmem:[%s278] sm:$0xff]
        %v316 = vld [vmem:[%s278 + $0x8] sm:$0xff]
        %v317 = vld [vmem:[%s278 + $0x10] sm:$0xff]
        %v318 = vld [vmem:[%s278 + $0x18] sm:$0xff]
        %v319 = vld [vmem:[%s278 + $0x20] sm:$0xff]
        %v320 = vld [vmem:[%s278 + $0x28] sm:$0xff]
        %v321 = vld [vmem:[%s278 + $0x30] sm:$0xff]
        %v322 = vld [vmem:[%s278 + $0x38] sm:$0xff]
        %v323 = vld [vmem:[%s278 + $0x40] sm:$0xff]
        %v324 = vld [vmem:[%s278 + $0x48] sm:$0xff]
        %v325 = vld [vmem:[%s278 + $0x50] sm:$0xff]
        %v326 = vld [vmem:[%s278 + $0x58] sm:$0xff]
        %v327 = vld [vmem:[%s278 + $0x60] sm:$0xff]
        %v328 = vld [vmem:[%s278 + $0x68] sm:$0xff]
        %v329 = vld [vmem:[%s278 + $0x70] sm:$0xff]
        %v330 = vld [vmem:[%s278 + $0x78] sm:$0xff]
        %v331 = vld [vmem:[%s278 + $0x80] sm:$0xff]
        %v332 = vld [vmem:[%s278 + $0x88] sm:$0xff]
        %v333 = vld [vmem:[%s278 + $0x90] sm:$0xff]
        %v334 = vld [vmem:[%s278 + $0x98] sm:$0xff]
        %v335 = vld [vmem:[%s278 + $0xa0] sm:$0xff]
        %v336 = vld [vmem:[%s278 + $0xa8] sm:$0xff]
        %v337 = vld [vmem:[%s278 + $0xb0] sm:$0xff]
        %v338 = vld [vmem:[%s278 + $0xb8] sm:$0xff]
        %v339 = vld [vmem:[%s278 + $0xc0] sm:$0xff]
        %v340 = vld [vmem:[%s278 + $0xc8] sm:$0xff]
        %v341 = vld [vmem:[%s278 + $0xd0] sm:$0xff]
        %v342 = vld [vmem:[%s278 + $0xd8] sm:$0xff]
        %v343 = vld [vmem:[%s278 + $0xe0] sm:$0xff]
        %v344 = vld [vmem:[%s278 + $0xe8] sm:$0xff]
        %v345 = vld [vmem:[%s278 + $0xf0] sm:$0xff]
        %v346 = vld [vmem:[%s278 + $0xf8] sm:$0xff]
        %v347 = vpack.c.bf16 %v317, %v315
        %v348 = vpack.c.bf16 %v318, %v316
        %v349 = vpack.c.bf16 %v321, %v319
        %v350 = vpack.c.bf16 %v322, %v320
        %v351 = vpack.c.bf16 %v325, %v323
        %v352 = vpack.c.bf16 %v326, %v324
        %v353 = vpack.c.bf16 %v329, %v327
        %v354 = vpack.c.bf16 %v330, %v328
        %v355 = vpack.c.bf16 %v333, %v331
        %v356 = vpack.c.bf16 %v334, %v332
        %v357 = vpack.c.bf16 %v337, %v335
        %v358 = vpack.c.bf16 %v338, %v336
        %v359 = vpack.c.bf16 %v341, %v339
        %v360 = vpack.c.bf16 %v342, %v340
        %v361 = vpack.c.bf16 %v345, %v343
        %v362 = vpack.c.bf16 %v346, %v344
        %v363 = vld [vmem:[#allocation5] sm:$0xf]
        %v364 = vld [vmem:[#allocation5 + $0x4] sm:$0xf]
        %v365 = vld [vmem:[#allocation5 + $0x8] sm:$0xf]
        %v366 = vld [vmem:[#allocation5 + $0xc] sm:$0xf]
        %v367 = vld [vmem:[#allocation5 + $0x10] sm:$0xf]
        %v368 = vld [vmem:[#allocation5 + $0x14] sm:$0xf]
        %v369 = vld [vmem:[#allocation5 + $0x18] sm:$0xf]
        %v370 = vld [vmem:[#allocation5 + $0x1c] sm:$0xf]
        %v371 = vld [vmem:[#allocation5 + $0x20] sm:$0xf]
        %v372 = vld [vmem:[#allocation5 + $0x24] sm:$0xf]
        %v373 = vld [vmem:[#allocation5 + $0x28] sm:$0xf]
        %v374 = vld [vmem:[#allocation5 + $0x2c] sm:$0xf]
        %v375 = vld [vmem:[#allocation5 + $0x30] sm:$0xf]
        %v376 = vld [vmem:[#allocation5 + $0x34] sm:$0xf]
        %v377 = vld [vmem:[#allocation5 + $0x38] sm:$0xf]
        %v378 = vld [vmem:[#allocation5 + $0x3c] sm:$0xf]
        %v379 = vld [vmem:[#allocation5 + $0x40] sm:$0xf]
        %v380 = vld [vmem:[#allocation5 + $0x44] sm:$0xf]
        %v381 = vld [vmem:[#allocation5 + $0x48] sm:$0xf]
        %v382 = vld [vmem:[#allocation5 + $0x4c] sm:$0xf]
        %v383 = vld [vmem:[#allocation5 + $0x50] sm:$0xf]
        %v384 = vld [vmem:[#allocation5 + $0x54] sm:$0xf]
        %v385 = vld [vmem:[#allocation5 + $0x58] sm:$0xf]
        %v386 = vld [vmem:[#allocation5 + $0x5c] sm:$0xf]
        %v387 = vld [vmem:[#allocation5 + $0x60] sm:$0xf]
        %v388 = vld [vmem:[#allocation5 + $0x64] sm:$0xf]
        %v389 = vld [vmem:[#allocation5 + $0x68] sm:$0xf]
        %v390 = vld [vmem:[#allocation5 + $0x6c] sm:$0xf]
        %v391 = vld [vmem:[#allocation5 + $0x70] sm:$0xf]
        %v392 = vld [vmem:[#allocation5 + $0x74] sm:$0xf]
        %v393 = vld [vmem:[#allocation5 + $0x78] sm:$0xf]
        %v394 = vld [vmem:[#allocation5 + $0x7c] sm:$0xf]
        %v395 = vld [vmem:[%s2] sm:$0x1]
        %v397 = vlaneseq
        %v398 = vshrl.u32 %v397, 7
        %v399 = vsub.s32 0, %v398
        %v400 = vrot.slane %v395, %v399
        %v434 = vunpack.c.l.b16 %v363
        %v435 = vunpack.c.l.b16 %v364
        %v436 = vunpack.c.l.b16 %v365
        %v437 = vunpack.c.l.b16 %v366
        %v438 = vunpack.c.l.b16 %v367
        %v439 = vunpack.c.l.b16 %v368
        %v440 = vunpack.c.l.b16 %v369
        %v441 = vunpack.c.l.b16 %v370
        %v442 = vunpack.c.l.b16 %v371
        %v443 = vunpack.c.l.b16 %v372
        %v444 = vunpack.c.l.b16 %v373
        %v445 = vunpack.c.l.b16 %v374
        %v446 = vunpack.c.l.b16 %v375
        %v447 = vunpack.c.l.b16 %v376
        %v448 = vunpack.c.l.b16 %v377
        %v449 = vunpack.c.l.b16 %v378
        %v450 = vunpack.c.l.b16 %v379
        %v451 = vunpack.c.l.b16 %v380
        %v452 = vunpack.c.l.b16 %v381
        %v453 = vunpack.c.l.b16 %v382
        %v454 = vunpack.c.l.b16 %v383
        %v455 = vunpack.c.l.b16 %v384
        %v456 = vunpack.c.l.b16 %v385
        %v457 = vunpack.c.l.b16 %v386
        %v458 = vunpack.c.l.b16 %v387
        %v459 = vunpack.c.l.b16 %v388
        %v460 = vunpack.c.l.b16 %v389
        %v461 = vunpack.c.l.b16 %v390
        %v462 = vunpack.c.l.b16 %v391
        %v463 = vunpack.c.l.b16 %v392
        %v464 = vunpack.c.l.b16 %v393
        %v465 = vunpack.c.l.b16 %v394
        %v466 = vpack.c.b16 %v435, %v434
        %v467 = vpack.c.b16 %v437, %v436
        %v468 = vpack.c.b16 %v439, %v438
        %v469 = vpack.c.b16 %v441, %v440
        %v470 = vpack.c.b16 %v443, %v442
        %v471 = vpack.c.b16 %v445, %v444
        %v472 = vpack.c.b16 %v447, %v446
        %v473 = vpack.c.b16 %v449, %v448
        %v474 = vpack.c.b16 %v451, %v450
        %v475 = vpack.c.b16 %v453, %v452
        %v476 = vpack.c.b16 %v455, %v454
        %v477 = vpack.c.b16 %v457, %v456
        %v478 = vpack.c.b16 %v459, %v458
        %v479 = vpack.c.b16 %v461, %v460
        %v480 = vpack.c.b16 %v463, %v462
        %v481 = vpack.c.b16 %v465, %v464
        %498 = vmatprep.subr.bf16.mxu0 0
        %499 = vmatpush1.bf16.msra.mxu0 %v466
        %500 = vmatprep.subr.bf16.mxu0 0
        %501 = vmatpush1.bf16.msra.mxu0 %v467
        %502 = vmatprep.subr.bf16.mxu0 0
        %503 = vmatpush1.bf16.msra.mxu0 %v468
        %504 = vmatprep.subr.bf16.mxu0 0
        %505 = vmatpush1.bf16.msra.mxu0 %v469
        %506 = vmatprep.subr.bf16.mxu0 0
        %507 = vmatpush1.bf16.msra.mxu0 %v470
        %508 = vmatprep.subr.bf16.mxu0 0
        %509 = vmatpush1.bf16.msra.mxu0 %v471
        %510 = vmatprep.subr.bf16.mxu0 0
        %511 = vmatpush1.bf16.msra.mxu0 %v472
        %512 = vmatprep.subr.bf16.mxu0 0
        %513 = vmatpush1.bf16.msra.mxu0 %v473
        %514 = vmatprep.subr.bf16.mxu0 0
        %515 = vmatpush1.bf16.msra.mxu0 %v474
        %516 = vmatprep.subr.bf16.mxu0 0
        %517 = vmatpush1.bf16.msra.mxu0 %v475
        %518 = vmatprep.subr.bf16.mxu0 0
        %519 = vmatpush1.bf16.msra.mxu0 %v476
        %520 = vmatprep.subr.bf16.mxu0 0
        %521 = vmatpush1.bf16.msra.mxu0 %v477
        %522 = vmatprep.subr.bf16.mxu0 0
        %523 = vmatpush1.bf16.msra.mxu0 %v478
        %524 = vmatprep.subr.bf16.mxu0 0
        %525 = vmatpush1.bf16.msra.mxu0 %v479
        %526 = vmatprep.subr.bf16.mxu0 0
        %527 = vmatpush1.bf16.msra.mxu0 %v480
        %528 = vmatprep.subr.bf16.mxu0 0
        %529 = vmatpush1.bf16.msra.mxu0 %v481
        %530 = vmatprep.mubr.bf16.mxu0 %v348
        %531 = vmatmul.mubr.bf16.gmra.mrb[0].mxu0 %v347
        %v532 = vpop.f32.mrb[0].mxu0
        %v533 = vadd.f32 %v400, %v532
        %v534 = vpop.f32.mrb[0].mxu0
        %v535 = vpop.f32.mrb[0].mxu0
        %v536 = vadd.f32 %v400, %v535
        %v537 = vpop.f32.mrb[0].mxu0
        %538 = vmatprep.mubr.bf16.mxu0 %v350
        %539 = vmatmul.mubr.bf16.gmra.mrb[0].mxu0 %v349
        %v540 = vpop.f32.mrb[0].mxu0
        %v541 = vadd.f32 %v400, %v540
        %v542 = vpop.f32.mrb[0].mxu0
        %v543 = vpop.f32.mrb[0].mxu0
        %v544 = vadd.f32 %v400, %v543
        %v545 = vpop.f32.mrb[0].mxu0
        %546 = vmatprep.mubr.bf16.mxu0 %v352
        %547 = vmatmul.mubr.bf16.gmra.mrb[0].mxu0 %v351
        %v548 = vpop.f32.mrb[0].mxu0
        %v549 = vadd.f32 %v400, %v548
        %v550 = vpop.f32.mrb[0].mxu0
        %v551 = vpop.f32.mrb[0].mxu0
        %v552 = vadd.f32 %v400, %v551
        %v553 = vpop.f32.mrb[0].mxu0
        %554 = vmatprep.mubr.bf16.mxu0 %v354
        %555 = vmatmul.mubr.bf16.gmra.mrb[0].mxu0 %v353
        %v556 = vpop.f32.mrb[0].mxu0
        %v557 = vadd.f32 %v400, %v556
        %v558 = vpop.f32.mrb[0].mxu0
        %v559 = vpop.f32.mrb[0].mxu0
        %v560 = vadd.f32 %v400, %v559
        %v561 = vpop.f32.mrb[0].mxu0
        %562 = vmatprep.mubr.bf16.mxu0 %v356
        %563 = vmatmul.mubr.bf16.gmra.mrb[0].mxu0 %v355
        %v564 = vpop.f32.mrb[0].mxu0
        %v565 = vadd.f32 %v400, %v564
        %v566 = vpop.f32.mrb[0].mxu0
        %v567 = vpop.f32.mrb[0].mxu0
        %v568 = vadd.f32 %v400, %v567
        %v569 = vpop.f32.mrb[0].mxu0
        %570 = vmatprep.mubr.bf16.mxu0 %v358
        %571 = vmatmul.mubr.bf16.gmra.mrb[0].mxu0 %v357
        %v572 = vpop.f32.mrb[0].mxu0
        %v573 = vadd.f32 %v400, %v572
        %v574 = vpop.f32.mrb[0].mxu0
        %v575 = vpop.f32.mrb[0].mxu0
        %v576 = vadd.f32 %v400, %v575
        %v577 = vpop.f32.mrb[0].mxu0
        %578 = vmatprep.mubr.bf16.mxu0 %v360
        %579 = vmatmul.mubr.bf16.gmra.mrb[0].mxu0 %v359
        %v580 = vpop.f32.mrb[0].mxu0
        %v581 = vadd.f32 %v400, %v580
        %v582 = vpop.f32.mrb[0].mxu0
        %v583 = vpop.f32.mrb[0].mxu0
        %v584 = vadd.f32 %v400, %v583
        %v585 = vpop.f32.mrb[0].mxu0
        %586 = vmatprep.mubr.bf16.mxu0 %v362
        %587 = vmatmul.mubr.bf16.gmra.mrb[0].mxu0 %v361
        %v588 = vpop.f32.mrb[0].mxu0
        %v589 = vadd.f32 %v400, %v588
        %v590 = vpop.f32.mrb[0].mxu0
        %v591 = vpop.f32.mrb[0].mxu0
        %v592 = vadd.f32 %v400, %v591
        %v593 = vpop.f32.mrb[0].mxu0
        %594 = vdwg.mxu0
        %v595 = vmax.f32 %v533, 0.0
        %v596 = vmax.f32 %v536, 0.0
        %v597 = vmax.f32 %v541, 0.0
        %v598 = vmax.f32 %v544, 0.0
        %v599 = vmax.f32 %v549, 0.0
        %v600 = vmax.f32 %v552, 0.0
        %v601 = vmax.f32 %v557, 0.0
        %v602 = vmax.f32 %v560, 0.0
        %v603 = vmax.f32 %v565, 0.0
        %v604 = vmax.f32 %v568, 0.0
        %v605 = vmax.f32 %v573, 0.0
        %v606 = vmax.f32 %v576, 0.0
        %v607 = vmax.f32 %v581, 0.0
        %v608 = vmax.f32 %v584, 0.0
        %v609 = vmax.f32 %v589, 0.0
        %v610 = vmax.f32 %v592, 0.0
        %v611 = vpack.c.bf16 %v596, %v595
        %v612 = vpack.c.bf16 %v598, %v597
        %v613 = vpack.c.bf16 %v600, %v599
        %v614 = vpack.c.bf16 %v602, %v601
        %v615 = vpack.c.bf16 %v604, %v603
        %v616 = vpack.c.bf16 %v606, %v605
        %v617 = vpack.c.bf16 %v608, %v607
        %v618 = vpack.c.bf16 %v610, %v609
        %v619 = vld [vmem:[%s3] sm:$0xf]
        %v620 = vld [vmem:[%s3 + $0x4] sm:$0xf]
        %v621 = vld [vmem:[%s3 + $0x8] sm:$0xf]
        %v622 = vld [vmem:[%s3 + $0xc] sm:$0xf]
        %v623 = vld [vmem:[%s3 + $0x10] sm:$0xf]
        %v624 = vld [vmem:[%s3 + $0x14] sm:$0xf]
        %v625 = vld [vmem:[%s3 + $0x18] sm:$0xf]
        %v626 = vld [vmem:[%s3 + $0x1c] sm:$0xf]
        %v627 = vld [vmem:[%s3 + $0x20] sm:$0xf]
        %v628 = vld [vmem:[%s3 + $0x24] sm:$0xf]
        %v629 = vld [vmem:[%s3 + $0x28] sm:$0xf]
        %v630 = vld [vmem:[%s3 + $0x2c] sm:$0xf]
        %v631 = vld [vmem:[%s3 + $0x30] sm:$0xf]
        %v632 = vld [vmem:[%s3 + $0x34] sm:$0xf]
        %v633 = vld [vmem:[%s3 + $0x38] sm:$0xf]
        %v634 = vld [vmem:[%s3 + $0x3c] sm:$0xf]
        %v635 = vld [vmem:[%s4] sm:$0x1]
        %v637 = vlaneseq
        %v638 = vshrl.u32 %v637, 7
        %v639 = vsub.s32 0, %v638
        %v640 = vrot.slane %v635, %v639
        %v658 = vunpack.c.l.b16 %v619
        %v659 = vunpack.c.l.b16 %v620
        %v660 = vunpack.c.l.b16 %v621
        %v661 = vunpack.c.l.b16 %v622
        %v662 = vunpack.c.l.b16 %v623
        %v663 = vunpack.c.l.b16 %v624
        %v664 = vunpack.c.l.b16 %v625
        %v665 = vunpack.c.l.b16 %v626
        %v666 = vunpack.c.l.b16 %v627
        %v667 = vunpack.c.l.b16 %v628
        %v668 = vunpack.c.l.b16 %v629
        %v669 = vunpack.c.l.b16 %v630
        %v670 = vunpack.c.l.b16 %v631
        %v671 = vunpack.c.l.b16 %v632
        %v672 = vunpack.c.l.b16 %v633
        %v673 = vunpack.c.l.b16 %v634
        %v674 = vpack.c.b16 %v659, %v658
        %v675 = vpack.c.b16 %v661, %v660
        %v676 = vpack.c.b16 %v663, %v662
        %v677 = vpack.c.b16 %v665, %v664
        %v678 = vpack.c.b16 %v667, %v666
        %v679 = vpack.c.b16 %v669, %v668
        %v680 = vpack.c.b16 %v671, %v670
        %v681 = vpack.c.b16 %v673, %v672
        %690 = vmatprep.subr.bf16.mxu0 0
        %691 = vmatpush1.bf16.msra.mxu0 %v674
        %692 = vmatprep.subr.bf16.mxu0 0
        %693 = vmatpush1.bf16.msra.mxu0 %v675
        %694 = vmatprep.subr.bf16.mxu0 0
        %695 = vmatpush1.bf16.msra.mxu0 %v676
        %696 = vmatprep.subr.bf16.mxu0 0
        %697 = vmatpush1.bf16.msra.mxu0 %v677
        %698 = vmatprep.subr.bf16.mxu0 0
        %699 = vmatpush1.bf16.msra.mxu0 %v678
        %700 = vmatprep.subr.bf16.mxu0 0
        %701 = vmatpush1.bf16.msra.mxu0 %v679
        %702 = vmatprep.subr.bf16.mxu0 0
        %703 = vmatpush1.bf16.msra.mxu0 %v680
        %704 = vmatprep.subr.bf16.mxu0 0
        %705 = vmatpush1.bf16.msra.mxu0 %v681
        %706 = vmatprep.subr.bf16.mxu0 0
        %707 = vmatpush1.bf16.msra.mxu0 0
        %708 = vmatprep.subr.bf16.mxu0 0
        %709 = vmatpush1.bf16.msra.mxu0 0
        %710 = vmatprep.subr.bf16.mxu0 0
        %711 = vmatpush1.bf16.msra.mxu0 0
        %712 = vmatprep.subr.bf16.mxu0 0
        %713 = vmatpush1.bf16.msra.mxu0 0
        %714 = vmatprep.subr.bf16.mxu0 0
        %715 = vmatpush1.bf16.msra.mxu0 0
        %716 = vmatprep.subr.bf16.mxu0 0
        %717 = vmatpush1.bf16.msra.mxu0 0
        %718 = vmatprep.subr.bf16.mxu0 0
        %719 = vmatpush1.bf16.msra.mxu0 0
        %720 = vmatprep.subr.bf16.mxu0 0
        %721 = vmatpush1.bf16.msra.mxu0 0
        %722 = vmatprep.mubr.bf16.mxu0 0
        %723 = vmatmul.mubr.bf16.gmra.mrb[0].mxu0 %v611
        %v724 = vpop.f32.mrb[0].mxu0
        %v725 = vadd.f32 %v640, %v724
        %v726 = vpop.f32.mrb[0].mxu0
        %v727 = vpop.f32.mrb[0].mxu0
        %v728 = vadd.f32 %v640, %v727
        %v729 = vpop.f32.mrb[0].mxu0
        %730 = vmatprep.mubr.bf16.mxu0 0
        %731 = vmatmul.mubr.bf16.gmra.mrb[0].mxu0 %v612
        %v732 = vpop.f32.mrb[0].mxu0
        %v733 = vadd.f32 %v640, %v732
        %v734 = vpop.f32.mrb[0].mxu0
        %v735 = vpop.f32.mrb[0].mxu0
        %v736 = vadd.f32 %v640, %v735
        %v737 = vpop.f32.mrb[0].mxu0
        %738 = vmatprep.mubr.bf16.mxu0 0
        %739 = vmatmul.mubr.bf16.gmra.mrb[0].mxu0 %v613
        %v740 = vpop.f32.mrb[0].mxu0
        %v741 = vadd.f32 %v640, %v740
        %v742 = vpop.f32.mrb[0].mxu0
        %v743 = vpop.f32.mrb[0].mxu0
        %v744 = vadd.f32 %v640, %v743
        %v745 = vpop.f32.mrb[0].mxu0
        %746 = vmatprep.mubr.bf16.mxu0 0
        %747 = vmatmul.mubr.bf16.gmra.mrb[0].mxu0 %v614
        %v748 = vpop.f32.mrb[0].mxu0
        %v749 = vadd.f32 %v640, %v748
        %v750 = vpop.f32.mrb[0].mxu0
        %v751 = vpop.f32.mrb[0].mxu0
        %v752 = vadd.f32 %v640, %v751
        %v753 = vpop.f32.mrb[0].mxu0
        %754 = vmatprep.mubr.bf16.mxu0 0
        %755 = vmatmul.mubr.bf16.gmra.mrb[0].mxu0 %v615
        %v756 = vpop.f32.mrb[0].mxu0
        %v757 = vadd.f32 %v640, %v756
        %v758 = vpop.f32.mrb[0].mxu0
        %v759 = vpop.f32.mrb[0].mxu0
        %v760 = vadd.f32 %v640, %v759
        %v761 = vpop.f32.mrb[0].mxu0
        %762 = vmatprep.mubr.bf16.mxu0 0
        %763 = vmatmul.mubr.bf16.gmra.mrb[0].mxu0 %v616
        %v764 = vpop.f32.mrb[0].mxu0
        %v765 = vadd.f32 %v640, %v764
        %v766 = vpop.f32.mrb[0].mxu0
        %v767 = vpop.f32.mrb[0].mxu0
        %v768 = vadd.f32 %v640, %v767
        %v769 = vpop.f32.mrb[0].mxu0
        %770 = vmatprep.mubr.bf16.mxu0 0
        %771 = vmatmul.mubr.bf16.gmra.mrb[0].mxu0 %v617
        %v772 = vpop.f32.mrb[0].mxu0
        %v773 = vadd.f32 %v640, %v772
        %v774 = vpop.f32.mrb[0].mxu0
        %v775 = vpop.f32.mrb[0].mxu0
        %v776 = vadd.f32 %v640, %v775
        %v777 = vpop.f32.mrb[0].mxu0
        %778 = vmatprep.mubr.bf16.mxu0 0
        %779 = vmatmul.mubr.bf16.gmra.mrb[0].mxu0 %v618
        %v780 = vpop.f32.mrb[0].mxu0
        %v781 = vadd.f32 %v640, %v780
        %v782 = vpop.f32.mrb[0].mxu0
        %v783 = vpop.f32.mrb[0].mxu0
        %v784 = vadd.f32 %v640, %v783
        %v785 = vpop.f32.mrb[0].mxu0
        %786 = vdwg.mxu0
        %v787 = vmax.f32 %v725, 0.0
        %v788 = vmax.f32 %v728, 0.0
        %v789 = vmax.f32 %v733, 0.0
        %v790 = vmax.f32 %v736, 0.0
        %v791 = vmax.f32 %v741, 0.0
        %v792 = vmax.f32 %v744, 0.0
        %v793 = vmax.f32 %v749, 0.0
        %v794 = vmax.f32 %v752, 0.0
        %v795 = vmax.f32 %v757, 0.0
        %v796 = vmax.f32 %v760, 0.0
        %v797 = vmax.f32 %v765, 0.0
        %v798 = vmax.f32 %v768, 0.0
        %v799 = vmax.f32 %v773, 0.0
        %v800 = vmax.f32 %v776, 0.0
        %v801 = vmax.f32 %v781, 0.0
        %v802 = vmax.f32 %v784, 0.0
        %v803 = vpack.c.bf16 %v788, %v787
        %v804 = vpack.c.bf16 %v790, %v789
        %v805 = vpack.c.bf16 %v792, %v791
        %v806 = vpack.c.bf16 %v794, %v793
        %v807 = vpack.c.bf16 %v796, %v795
        %v808 = vpack.c.bf16 %v798, %v797
        %v809 = vpack.c.bf16 %v800, %v799
        %v810 = vpack.c.bf16 %v802, %v801
        %v811 = vld [vmem:[%s5] sm:$0xf]
        %v812 = vld [vmem:[%s6] sm:$0xff]
        %814 = vset.pattern.permute.xlu0 0
        %815 = vperm.xlu0 %814, %v812
        %v816 = vpop.permute.xlu0 %815
        %vm818 = vcmask 523264
        %v820 = vsel %vm818, %v811, 0
        %v823 = vsel %vm818, %v803, 0
        %v826 = vsel %vm818, %v804, 0
        %v829 = vsel %vm818, %v805, 0
        %v832 = vsel %vm818, %v806, 0
        %v835 = vsel %vm818, %v807, 0
        %v838 = vsel %vm818, %v808, 0
        %v841 = vsel %vm818, %v809, 0
        %v844 = vsel %vm818, %v810, 0
        %846 = vmatprep.subr.bf16.mxu0 0
        %847 = vmatpush1.bf16.xpose.msra.mxu0 %v823
        %848 = vmatprep.subr.bf16.mxu0 0
        %849 = vmatpush1.bf16.xpose.msra.mxu0 %v826
        %850 = vmatprep.subr.bf16.mxu0 0
        %851 = vmatpush1.bf16.xpose.msra.mxu0 %v829
        %852 = vmatprep.subr.bf16.mxu0 0
        %853 = vmatpush1.bf16.xpose.msra.mxu0 %v832
        %854 = vmatprep.subr.bf16.mxu0 0
        %855 = vmatpush1.bf16.xpose.msra.mxu0 %v835
        %856 = vmatprep.subr.bf16.mxu0 0
        %857 = vmatpush1.bf16.xpose.msra.mxu0 %v838
        %858 = vmatprep.subr.bf16.mxu0 0
        %859 = vmatpush1.bf16.xpose.msra.mxu0 %v841
        %860 = vmatprep.subr.bf16.mxu0 0
        %861 = vmatpush1.bf16.xpose.msra.mxu0 %v844
        %862 = vmatprep.subr.bf16.mxu0 0
        %863 = vmatpush1.bf16.xpose.msra.mxu0 0
        %864 = vmatprep.subr.bf16.mxu0 0
        %865 = vmatpush1.bf16.xpose.msra.mxu0 0
        %866 = vmatprep.subr.bf16.mxu0 0
        %867 = vmatpush1.bf16.xpose.msra.mxu0 0
        %868 = vmatprep.subr.bf16.mxu0 0
        %869 = vmatpush1.bf16.xpose.msra.mxu0 0
        %870 = vmatprep.subr.bf16.mxu0 0
        %871 = vmatpush1.bf16.xpose.msra.mxu0 0
        %872 = vmatprep.subr.bf16.mxu0 0
        %873 = vmatpush1.bf16.xpose.msra.mxu0 0
        %874 = vmatprep.subr.bf16.mxu0 0
        %875 = vmatpush1.bf16.xpose.msra.mxu0 0
        %876 = vmatprep.subr.bf16.mxu0 0
        %877 = vmatpush1.bf16.xpose.msra.mxu0 0
        %878 = vmatprep.mubr.bf16.mxu0 0
        %879 = vmatmul.mubr.bf16.gmra.mrb[0].mxu0 %v820
        %v880 = vpop.f32.mrb[0].mxu0
        %v881 = vadd.f32 %v816, %v880
        %v882 = vpop.f32.mrb[0].mxu0
        %v883 = vpop.f32.mrb[0].mxu0
        %v884 = vpop.f32.mrb[0].mxu0
        %885 = vdwg.mxu0
        %886 = vst [vmem:[%s312] sm:$0xff] %v881
        %s887 = sand.u32 %s185, 1
        %s888 = scalar_lea.sflag [#allocation4], %s887
        %s889 = sand.u32 %s185, 1
        %s890 = smul.addr %s889, 8
        %s891 = scalar_lea.vmem [#allocation7], %s890
        // Predicated region
        $region57: #{tpu_custom_call.1} parent=47 // pred_check
          %p892 = pneg %p195
        $region58: #{tpu_custom_call.1} parent=47 // pred_check_branch
          %894 = sbr.rel (%p892) target = $region60
        $region59: #{tpu_custom_call.1} parent=47 // pred_region
          %s896 = ssub.s32 128, 128
          %897 = vsyncadd %s888, %s896
          %s898 = smul.addr %s25, 128
          %s899 = scalar_lea.hbm %s7, %s898
          %s901 = sshll.u32 %s891, 4
          %s902 = int_to_ptr.vmem [resolvable:$true] %s901
          %904 = dma.vmem_to_hbm [thread:$0]  %s902, 128, %s899, %s888
        $region60: #{tpu_custom_call.1} parent=47 // pred_fallthru
          _
      $region48: #{tpu_custom_call.1} parent=5 // pred_fallthru
        _
      %p905 = scmp.le.s32.totalorder 2, %s20
      // Predicated region
      $region61: #{tpu_custom_call.1} parent=5 // pred_check
        %p906 = pneg %p905
      $region62: #{tpu_custom_call.1} parent=5 // pred_check_branch
        %908 = sbr.rel (%p906) target = $region64
      $region63: #{tpu_custom_call.1} parent=5 // pred_region
        %s909 = ssub.s32 %s20, 2
        // Predicated region
        $region65: #{tpu_custom_call.1} parent=63 // pred_check
          %p910 = pneg %p201
        $region66: #{tpu_custom_call.1} parent=63 // pred_check_branch
          %912 = sbr.rel (%p910) target = $region68
        $region67: #{tpu_custom_call.1} parent=63 // pred_region
          %s913 = sand.u32 %s186, 1
          %s914 = scalar_lea.sflag [#allocation4], %s913
          %s915 = sand.u32 %s186, 1
          %s916 = smul.addr %s915, 8
          %s917 = scalar_lea.vmem [#allocation7], %s916
          %918 = dma.done %s914, 128
        $region68: #{tpu_custom_call.1} parent=63 // pred_fallthru
          _
      $region64: #{tpu_custom_call.1} parent=5 // pred_fallthru
        _
    $region6: #{tpu_custom_call.1} parent=1 // loop_footer
      %s24 = sadd.s32 1, %s20
    $region7: #{tpu_custom_call.1} parent=1 // loop_footer_branch
      %19 = sbr.rel target = $region3
    $region8: #{tpu_custom_call.1} parent=1 // loop_exit
      _
    %919 = vsyncpa [#allocation3], 1
    %s920 = scalar_lea.sflag [#allocation3], 1
    %921 = vsyncpa %s920, 1
    %922 = vsyncpa [#allocation6], 1
    %923 = vsyncpa [#allocation4], 1
    %s924 = scalar_lea.sflag [#allocation4], 1
    %925 = vsyncpa %s924, 1

</llo_original>
